<compile_context>
chip_gen: v5e
topology: v5e:2x2
jax: 0.10.0
libtpu: 0.0.40
codegen_flags: <defaults>
</compile_context>

<pallas_src>
import jax
import jax.numpy as jnp
from jax.experimental import pallas as pl
from jax.experimental.pallas import tpu as pltpu


_OUT_LANES = 128  # lane-dense output slab; cols 0,1 carry (bmi, cmr)


# ---------------------------------------------------------------------------
# helpers
# ---------------------------------------------------------------------------

def _round_up(n, m):
    return ((n + m - 1) // m) * m


def _cdiv(a, b):
    return (a + b - 1) // b


def _pad_to(a, shape):
    pads = [(0, s - d) for d, s in zip(a.shape, shape)]
    return jnp.pad(a, pads)


def _pick_tile_b(batch, per_row_bytes, sub, weight_bytes, budget_bytes=40 << 20):
    """Largest batch tile (multiple of `sub`, <=1024 rows) that fits the VMEM
    budget after reserving the (double-buffered) resident weights.  Measured
    roofline gains flatten past ~512-1024 rows, so don't chase more."""
    avail = max(budget_bytes - 2 * weight_bytes, 2 << 20)
    t = (avail // max(per_row_bytes, 1)) // sub * sub
    t = max(sub, min(t, 1024))
    t = min(t, _round_up(batch, sub))
    # Guarantee >=2 grid steps when the batch allows, so ("parallel",) can
    # split the batch across v7x's two TensorCores (one extra ~0.35us step
    # elsewhere -- negligible).
    if _cdiv(batch, t) < 2 and batch >= 2 * sub:
        t = _round_up(_cdiv(batch, 2), sub)
    return t


# ---------------------------------------------------------------------------
# kernel
# ---------------------------------------------------------------------------

def _multitask_kernel(x_ref, w0_ref, b0_ref, w1_ref, b1_ref, wh_ref, bh_ref,
                      out_ref):
    cdt = w0_ref.dtype
    # In-kernel cast of x (f32 in HBM) to the MXU operand dtype: avoids a
    # separate wrapper-side pad/cast pass over the activations in HBM.
    x = x_ref[...].astype(cdt)
    # Layer 0: x @ w0 + b0, ReLU   (f32 accumulate / bias / ReLU)
    h = jnp.dot(x, w0_ref[...], preferred_element_type=jnp.float32) + b0_ref[...]
    h = jnp.maximum(h, 0.0)
    # Layer 1: h @ w1 + b1, ReLU
    h = jnp.dot(h.astype(cdt), w1_ref[...],
                preferred_element_type=jnp.float32) + b1_ref[...]
    h = jnp.maximum(h, 0.0)
    # Fused (layer-2 + both heads): h @ W_fused + b_fused -> lane-dense slab
    y = jnp.dot(h.astype(cdt), wh_ref[...],
                preferred_element_type=jnp.float32) + bh_ref[...]
    out_ref[...] = y.astype(out_ref.dtype)


# ---------------------------------------------------------------------------
# param preparation (one-time per weight update)
# ---------------------------------------------------------------------------

def prepare_params(params, compute_dtype=jnp.bfloat16):
    """Constant folding + lane padding.

    * Folds the third Linear into both heads (exact -- no activation between
      mlp_net's last Linear and the heads):  W_fused = w2 @ [wb|wc],
      b_fused = b2 @ [wb|wc] + [bb|bc].
    * Pads only lane (output-feature) dims to multiples of 128.  Contraction
      dims stay at their real sizes -- full-dim blocks are legal, so no
      activation padding is ever needed at call time.
    * compute_dtype=bf16 by default: the MXU is natively bf16 on v5e, v6e and
      v7x; f32 operands cost multiple MXU passes on every generation.

    Returns (weights_dict, real_dims) with real_dims = (l0, l1, l2) for the
    cost estimate.
    """
    w0, b0 = params["w0"], params["b0"]
    w1, b1 = params["w1"], params["b1"]
    w2, b2 = params["w2"], params["b2"]
    wb, bb = params["wb"], params["bb"]
    wc, bc = params["wc"], params["bc"]

    l0, l1 = w0.shape
    l2 = w2.shape[0]

    w_heads = jnp.concatenate([wb, wc], axis=1)          # [l3, 2]
    b_heads = jnp.concatenate([bb, bc], axis=1)          # [1, 2]
    w_fused = w2 @ w_heads                               # [l2, 2]  (fold in f32)
    b_fused = b2 @ w_heads + b_heads                     # [1, 2]

    l1p = _round_up(l1, 128)
    l2p = _round_up(l2, 128)

    prepared = {
        "w0": _pad_to(w0, (l0, l1p)).astype(compute_dtype),
        "b0": _pad_to(b0, (1, l1p)).astype(jnp.float32),
        "w1": _pad_to(w1, (l1p, l2p)).astype(compute_dtype),
        "b1": _pad_to(b1, (1, l2p)).astype(jnp.float32),
        "wh": _pad_to(w_fused, (l2p, _OUT_LANES)).astype(compute_dtype),
        "bh": _pad_to(b_fused, (1, _OUT_LANES)).astype(jnp.float32),
    }
    return prepared, (l0, l1, l2)


# ---------------------------------------------------------------------------
# forward wrapper
# ---------------------------------------------------------------------------

def multitask_forward(x, prepared, *, real_dims=None, tile_b=None):
    """x: [B, in_features] float32 (unpadded).  prepared: prepare_params()[0].

    real_dims / tile_b must be static (hashable) under jit.
    Returns (out_bmi, out_cmr), each [B, 1] float32.
    """
    B, in_feat = x.shape
    w0, b0 = prepared["w0"], prepared["b0"]
    w1, b1 = prepared["w1"], prepared["b1"]
    wh, bh = prepared["wh"], prepared["bh"]
    assert w0.shape[0] == in_feat, "x feature dim must match prepared w0"
    l1p = w0.shape[1]
    l2p, out_w = wh.shape

    out_dtype = w0.dtype if w0.dtype == jnp.bfloat16 else jnp.float32
    out_isz = jnp.dtype(out_dtype).itemsize
    sub = 16 if out_dtype == jnp.bfloat16 else 8   # bf16 packs 16 rows/sublane group

    weight_bytes = sum(int(a.size) * a.dtype.itemsize
                       for a in (w0, b0, w1, b1, wh, bh))
    per_row = (2 * in_feat * x.dtype.itemsize      # x tile, double-buffered, f32
               + 2 * out_w * out_isz               # out tile, double-buffered
               + 4 * max(l1p, l2p) * 4)            # f32 hidden activations (headroom)
    if tile_b is None:
        tile_b = _pick_tile_b(B, per_row, sub, weight_bytes)

    # Partial last block is fine: out-of-range rows hold garbage but only ever
    # influence their own (discarded) output rows.
    grid = (_cdiv(B, tile_b),)

    # Real (unpadded, folded) work -- advisory scheduling hint only.
    l0, l1, l2 = real_dims if real_dims is not None else (in_feat, l1p, l2p)
    flops = 2 * B * (l0 * l1 + l1 * l2 + l2 * 2)
    bytes_accessed = B * l0 * x.dtype.itemsize + weight_bytes + B * 2 * 4

    # Explicit scoped-VMEM limit (v5e default is only 16 MiB); weights counted
    # at 2x for the pipeline's buffer pair, capped at v7x's 64 MiB physical.
    vmem_need = 2 * weight_bytes + tile_b * per_row + (2 << 20)
    vmem_limit = int(min(max(32 << 20, vmem_need), 64 << 20))

    out = pl.pallas_call(
        _multitask_kernel,
        out_shape=jax.ShapeDtypeStruct((B, out_w), out_dtype),
        grid=grid,
        in_specs=[
            # x: batch-tiled, full (unpadded) feature dim, f32 -> cast in-kernel.
            pl.BlockSpec((tile_b, in_feat), lambda i: (i, 0)),
            # Weights/biases: constant index_map -> DMA'd once, VMEM-resident
            # across all grid steps (Mosaic skips re-copies for unchanged
            # block indices).  If xprof ever shows exposed x/out DMA, deepen
            # those two specs with pipeline_mode=pl.Buffered(3).
            pl.BlockSpec((in_feat, l1p), lambda i: (0, 0)),
            pl.BlockSpec((1, l1p), lambda i: (0, 0)),
            pl.BlockSpec((l1p, l2p), lambda i: (0, 0)),
            pl.BlockSpec((1, l2p), lambda i: (0, 0)),
            pl.BlockSpec((l2p, out_w), lambda i: (0, 0)),
            pl.BlockSpec((1, out_w), lambda i: (0, 0)),
        ],
        out_specs=pl.BlockSpec((tile_b, out_w), lambda i: (i, 0)),
        compiler_params=pltpu.CompilerParams(
            dimension_semantics=("parallel",),
            vmem_limit_bytes=vmem_limit),
        cost_estimate=pl.CostEstimate(
            flops=flops, transcendentals=0, bytes_accessed=bytes_accessed),
    )(x, w0, b0, w1, b1, wh, bh)

    heads = out[:, :2].astype(jnp.float32)   # single post-kernel slice
    return heads[:, 0:1], heads[:, 1:2]


# ---------------------------------------------------------------------------
# init + pure-JAX reference
# ---------------------------------------------------------------------------

def init_params(key, layer_sizes):
    """Deterministic init mirroring nn.Linear (weights stored as [in, out])."""
    l0, l1, l2, l3 = layer_sizes
    dims = [(l0, l1), (l1, l2), (l2, l3), (l3, 1), (l3, 1)]
    names = ["0", "1", "2", "b", "c"]
    params = {}
    keys = jax.random.split(key, 2 * len(dims))
    for i, ((fin, fout), n) in enumerate(zip(dims, names)):
        bound = 1.0 / jnp.sqrt(jnp.float32(fin))
        w = jax.random.uniform(keys[2 * i], (fin, fout), jnp.float32, -bound, bound)
        b = jax.random.uniform(keys[2 * i + 1], (1, fout), jnp.float32, -bound, bound)
        params["w" + n] = w
        params["b" + n] = b
    return params


def reference_forward(x, p):
    h = jnp.maximum(x @ p["w0"] + p["b0"], 0.0)
    h = jnp.maximum(h @ p["w1"] + p["b1"], 0.0)
    h = h @ p["w2"] + p["b2"]
    return h @ p["wb"] + p["bb"], h @ p["wc"] + p["bc"]


# ---------------------------------------------------------------------------
# demo / correctness check
# ---------------------------------------------------------------------------

if __name__ == "__main__":
    # Small shapes consistent with the module structure
    # (real module: layer_sizes=[11333, 500, 11348, 500], two 1-unit heads).
    layer_sizes = [96, 48, 64, 32]
    batch = 200   # not a multiple of the tile -> exercises the partial last block

    key = jax.random.PRNGKey(0)
    k_x, k_p = jax.random.split(key)
    x = jax.random.normal(k_x, (batch, layer_sizes[0]), jnp.float32)
    params = init_params(k_p, layer_sizes)

    # bf16 MXU operands by default (f32 accumulate everywhere); pass
    # compute_dtype=jnp.float32 to match PyTorch f32 numerics more tightly.
    prepared, real_dims = prepare_params(params)

    fwd = jax.jit(multitask_forward, static_argnames=("real_dims", "tile_b"))
    out_bmi, out_cmr = fwd(x, prepared, real_dims=real_dims)   # tile_b auto-picked
    jax.block_until_ready((out_bmi, out_cmr))

    ref_bmi, ref_cmr = reference_forward(x, params)
    assert out_bmi.shape == (batch, 1) and out_cmr.shape == (batch, 1)
    # bf16 operand path: loosened tolerance vs the f32 reference.
    assert jnp.allclose(out_bmi, ref_bmi, atol=5e-2, rtol=5e-2), \
        float(jnp.max(jnp.abs(out_bmi - ref_bmi)))
    assert jnp.allclose(out_cmr, ref_cmr, atol=5e-2, rtol=5e-2), \
        float(jnp.max(jnp.abs(out_cmr - ref_cmr)))

    print("KERNEL_OK")
</pallas_src>

<mosaic_0001>
module attributes {stable_mosaic.version = 11 : i64} {
  func.func @_multitask_kernel(%arg0: i32, %arg1: memref<112x96xf32, #tpu.memory_space<vmem>>, %arg2: memref<96x128xbf16, #tpu.memory_space<vmem>>, %arg3: memref<1x128xf32, #tpu.memory_space<vmem>>, %arg4: memref<128x128xbf16, #tpu.memory_space<vmem>>, %arg5: memref<1x128xf32, #tpu.memory_space<vmem>>, %arg6: memref<128x128xbf16, #tpu.memory_space<vmem>>, %arg7: memref<1x128xf32, #tpu.memory_space<vmem>>, %arg8: memref<112x128xbf16, #tpu.memory_space<vmem>>) attributes {dimension_semantics = [#tpu.dimension_semantics<parallel>], iteration_bounds = array<i64: 2>, scalar_prefetch = 0 : i64, scratch_operands = 0 : i64, tpu.core_type = #tpu.core_type<tc>, window_params = [{transform_indices = @transform_0, window_bounds = array<i64: 112, 96>}, {pipeline_mode = #tpu.pipeline_mode<synchronous>, transform_indices = @transform_1, window_bounds = array<i64: 96, 128>}, {pipeline_mode = #tpu.pipeline_mode<synchronous>, transform_indices = @transform_2, window_bounds = array<i64: 1, 128>}, {pipeline_mode = #tpu.pipeline_mode<synchronous>, transform_indices = @transform_3, window_bounds = array<i64: 128, 128>}, {pipeline_mode = #tpu.pipeline_mode<synchronous>, transform_indices = @transform_4, window_bounds = array<i64: 1, 128>}, {pipeline_mode = #tpu.pipeline_mode<synchronous>, transform_indices = @transform_5, window_bounds = array<i64: 128, 128>}, {pipeline_mode = #tpu.pipeline_mode<synchronous>, transform_indices = @transform_6, window_bounds = array<i64: 1, 128>}, {transform_indices = @transform_7, window_bounds = array<i64: 112, 128>}]} {
    %c0 = arith.constant 0 : index
    %c0_0 = arith.constant 0 : index
    %0 = vector.load %arg1[%c0, %c0_0] : memref<112x96xf32, #tpu.memory_space<vmem>>, vector<112x96xf32>
    %1 = arith.truncf %0 : vector<112x96xf32> to vector<112x96xbf16>
    %c0_1 = arith.constant 0 : index
    %c0_2 = arith.constant 0 : index
    %2 = vector.load %arg2[%c0_1, %c0_2] : memref<96x128xbf16, #tpu.memory_space<vmem>>, vector<96x128xbf16>
    %cst = arith.constant dense<0.000000e+00> : vector<112x128xf32>
    %3 = tpu.matmul %1, %2, %cst {dimension_numbers = #tpu.dot_dimension_numbers<[1], [0], [0], [1], [0, 0, 1, 1], [], []>} : vector<112x96xbf16>, vector<96x128xbf16>, vector<112x128xf32> -> vector<112x128xf32>
    %c0_3 = arith.constant 0 : index
    %c0_4 = arith.constant 0 : index
    %4 = vector.load %arg3[%c0_3, %c0_4] : memref<1x128xf32, #tpu.memory_space<vmem>>, vector<1x128xf32>
    %5 = vector.broadcast %4 : vector<1x128xf32> to vector<112x128xf32>
    %6 = arith.addf %3, %5 : vector<112x128xf32>
    %cst_5 = arith.constant 0.000000e+00 : f32
    %7 = vector.broadcast %cst_5 : f32 to vector<112x128xf32>
    %8 = arith.maximumf %6, %7 : vector<112x128xf32>
    %9 = arith.truncf %8 : vector<112x128xf32> to vector<112x128xbf16>
    %c0_6 = arith.constant 0 : index
    %c0_7 = arith.constant 0 : index
    %10 = vector.load %arg4[%c0_6, %c0_7] : memref<128x128xbf16, #tpu.memory_space<vmem>>, vector<128x128xbf16>
    %cst_8 = arith.constant dense<0.000000e+00> : vector<112x128xf32>
    %11 = tpu.matmul %9, %10, %cst_8 {dimension_numbers = #tpu.dot_dimension_numbers<[1], [0], [0], [1], [0, 0, 1, 1], [], []>} : vector<112x128xbf16>, vector<128x128xbf16>, vector<112x128xf32> -> vector<112x128xf32>
    %c0_9 = arith.constant 0 : index
    %c0_10 = arith.constant 0 : index
    %12 = vector.load %arg5[%c0_9, %c0_10] : memref<1x128xf32, #tpu.memory_space<vmem>>, vector<1x128xf32>
    %13 = vector.broadcast %12 : vector<1x128xf32> to vector<112x128xf32>
    %14 = arith.addf %11, %13 : vector<112x128xf32>
    %cst_11 = arith.constant 0.000000e+00 : f32
    %15 = vector.broadcast %cst_11 : f32 to vector<112x128xf32>
    %16 = arith.maximumf %14, %15 : vector<112x128xf32>
    %17 = arith.truncf %16 : vector<112x128xf32> to vector<112x128xbf16>
    %c0_12 = arith.constant 0 : index
    %c0_13 = arith.constant 0 : index
    %18 = vector.load %arg6[%c0_12, %c0_13] : memref<128x128xbf16, #tpu.memory_space<vmem>>, vector<128x128xbf16>
    %cst_14 = arith.constant dense<0.000000e+00> : vector<112x128xf32>
    %19 = tpu.matmul %17, %18, %cst_14 {dimension_numbers = #tpu.dot_dimension_numbers<[1], [0], [0], [1], [0, 0, 1, 1], [], []>} : vector<112x128xbf16>, vector<128x128xbf16>, vector<112x128xf32> -> vector<112x128xf32>
    %c0_15 = arith.constant 0 : index
    %c0_16 = arith.constant 0 : index
    %20 = vector.load %arg7[%c0_15, %c0_16] : memref<1x128xf32, #tpu.memory_space<vmem>>, vector<1x128xf32>
    %21 = vector.broadcast %20 : vector<1x128xf32> to vector<112x128xf32>
    %22 = arith.addf %19, %21 : vector<112x128xf32>
    %23 = arith.truncf %22 : vector<112x128xf32> to vector<112x128xbf16>
    %c0_17 = arith.constant 0 : index
    %c0_18 = arith.constant 0 : index
    %24 = vector.load %arg8[%c0_17, %c0_18] : memref<112x128xbf16, #tpu.memory_space<vmem>>, vector<112x128xbf16>
    tpu.vector_store %arg8[%c0_17, %c0_18], %23 {strides = array<i32>} : memref<112x128xbf16, #tpu.memory_space<vmem>>, vector<112x128xbf16>,
    return
  }
  func.func @transform_0(%arg0: i32) -> (i32, i32) {
    %c0_i32 = arith.constant 0 : i32
    %c0_i32_0 = arith.constant 0 : i32
    return %arg0, %c0_i32 : i32, i32
  }
  func.func @transform_1(%arg0: i32) -> (i32, i32) {
    %c0_i32 = arith.constant 0 : i32
    %c0_i32_0 = arith.constant 0 : i32
    %c0_i32_1 = arith.constant 0 : i32
    return %c0_i32, %c0_i32_0 : i32, i32
  }
  func.func @transform_2(%arg0: i32) -> (i32, i32) {
    %c0_i32 = arith.constant 0 : i32
    %c0_i32_0 = arith.constant 0 : i32
    %c0_i32_1 = arith.constant 0 : i32
    return %c0_i32, %c0_i32_0 : i32, i32
  }
  func.func @transform_3(%arg0: i32) -> (i32, i32) {
    %c0_i32 = arith.constant 0 : i32
    %c0_i32_0 = arith.constant 0 : i32
    %c0_i32_1 = arith.constant 0 : i32
    return %c0_i32, %c0_i32_0 : i32, i32
  }
  func.func @transform_4(%arg0: i32) -> (i32, i32) {
    %c0_i32 = arith.constant 0 : i32
    %c0_i32_0 = arith.constant 0 : i32
    %c0_i32_1 = arith.constant 0 : i32
    return %c0_i32, %c0_i32_0 : i32, i32
  }
  func.func @transform_5(%arg0: i32) -> (i32, i32) {
    %c0_i32 = arith.constant 0 : i32
    %c0_i32_0 = arith.constant 0 : i32
    %c0_i32_1 = arith.constant 0 : i32
    return %c0_i32, %c0_i32_0 : i32, i32
  }
  func.func @transform_6(%arg0: i32) -> (i32, i32) {
    %c0_i32 = arith.constant 0 : i32
    %c0_i32_0 = arith.constant 0 : i32
    %c0_i32_1 = arith.constant 0 : i32
    return %c0_i32, %c0_i32_0 : i32, i32
  }
  func.func @transform_7(%arg0: i32) -> (i32, i32) {
    %c0_i32 = arith.constant 0 : i32
    %c0_i32_0 = arith.constant 0 : i32
    return %arg0, %c0_i32 : i32, i32
  }
}

</mosaic_0001>

<llo_original>
// kernel: multitask_forward.1
$region0: #{multitask_forward.1}
  #allocation0 [shape = 'u32[]', space=smem, size = 0x4, offset = 0x4, fixed_abs, tag = 'smem constant byte address 0x4 - core index']
  #allocation1 [shape = 'u32[72,128]{1,0:T(1,128)}', space=vmem, size = 0x9000, scoped, tag = 'internal scratch']
  %s0 = inlined_call_operand.vmem [shape: f32[200,96], index: 0, kind: input, shape index: {}]
  %s1 = inlined_call_operand.vmem [shape: bf16[96,128], index: 1, kind: input, shape index: {}]
  %s2 = inlined_call_operand.vmem [shape: f32[1,128], index: 2, kind: input, shape index: {}]
  %s3 = inlined_call_operand.vmem [shape: bf16[128,128], index: 3, kind: input, shape index: {}]
  %s4 = inlined_call_operand.vmem [shape: f32[1,128], index: 4, kind: input, shape index: {}]
  %s5 = inlined_call_operand.vmem [shape: bf16[128,128], index: 5, kind: input, shape index: {}]
  %s6 = inlined_call_operand.vmem [shape: f32[1,128], index: 6, kind: input, shape index: {}]
  %s7 = inlined_call_operand.vmem [shape: bf16[200,128], index: 7, kind: output, shape index: {}]
  %s8 = sld [smem:[#allocation0]]
  $region105: #{multitask_forward.1} parent=0
    _
  %s10 = ssub.s32 1, %s8
  %s11 = scalar_select 0, %s10, %s8
  $region1: #{multitask_forward.1} parent=0
    #allocation2 [shape = 'u8[57344]{0}', space=vmem, size = 0xe000, scoped, tag = 'output window, operand 0']
    loop: start=0, step=1, limit=4
    $region2: #{multitask_forward.1} parent=1 // loop_pre_header
      _
    $region3: #{multitask_forward.1} parent=1 // loop_header
      %s13 = sphi 0, %s17
      %p14 = scmp.ge.s32.totalorder %s13, 4
      %s23 = sphi 0, %s25
      %s26 = sphi 0, %s23
      %s27 = sphi 0, %s26
      %s43 = sphi 0, %s27
      %s47 = sphi 0, %s47
      %s49 = sphi 0, %s47
      %s50 = sphi 0, %s49
      %s64 = sphi 0, %s50
      %s68 = sphi 0, %s68
      %s70 = sphi 0, %s68
      %s71 = sphi 0, %s70
      %s85 = sphi 0, %s71
      %s89 = sphi 0, %s89
      %s91 = sphi 0, %s89
      %s92 = sphi 0, %s91
      %s106 = sphi 0, %s92
      %s110 = sphi 0, %s110
      %s112 = sphi 0, %s110
      %s113 = sphi 0, %s112
      %s127 = sphi 0, %s113
      %s131 = sphi 0, %s131
      %s133 = sphi 0, %s131
      %s134 = sphi 0, %s133
      %s148 = sphi 0, %s134
      %s152 = sphi 0, %s152
      %s154 = sphi 0, %s152
      %s155 = sphi 0, %s154
      %s169 = sphi 0, %s155
      %s175 = sphi 0, %s177
      %s178 = sphi 0, %s175
      %s179 = sphi 0, %s178
      %s195 = sphi 0, %s179
    $region4: #{multitask_forward.1} parent=1 // loop_header_branch
      %16 = sbr.rel (%p14) target = $region8
    $region5: #{multitask_forward.1} parent=1 // loop_body
      %s18 = ssub.s32 %s13, 1
      %s19 = ssub.s32 %s13, 2
      %s20 = sadd.s32 %s13, 1
      %s21 = ssub.s32 %s13, %s20
      %p22 = scmp.eq.s32.totalorder %s21, 0
      %s24 = sadd.s32 %s23, 1
      %s25 = scalar_select %p22, %s23, %s24
      %p28 = pneg %p22
      %p29 = scmp.eq.s32.totalorder %s13, 1
      %p30 = por %p28, %p29
      %p31 = scmp.ne.s32.totalorder %s23, %s26
      %p32 = scmp.eq.s32.totalorder %s13, 0
      %p33 = por %p31, %p32
      %p34 = scmp.ne.s32.totalorder %s23, %s26
      %p35 = scmp.eq.s32.totalorder %s18, 1
      %p36 = por %p34, %p35
      %p37 = scmp.ne.s32.totalorder %s26, %s27
      %p38 = scmp.eq.s32.totalorder %s18, 0
      %p39 = por %p37, %p38
      %p40 = scmp.ne.s32.totalorder %s26, %s27
      %p41 = scmp.eq.s32.totalorder %s19, 1
      %p42 = por %p40, %p41
      %p44 = scmp.ne.s32.totalorder %s27, %s43
      %p45 = scmp.eq.s32.totalorder %s19, 0
      %p46 = por %p44, %p45
      %s48 = sadd.s32 %s47, 1
      %p51 = scmp.eq.s32.totalorder %s13, 1
      %p52 = scmp.ne.s32.totalorder %s47, %s49
      %p53 = scmp.eq.s32.totalorder %s13, 0
      %p54 = por %p52, %p53
      %p55 = scmp.ne.s32.totalorder %s47, %s49
      %p56 = scmp.eq.s32.totalorder %s18, 1
      %p57 = por %p55, %p56
      %p58 = scmp.ne.s32.totalorder %s49, %s50
      %p59 = scmp.eq.s32.totalorder %s18, 0
      %p60 = por %p58, %p59
      %p61 = scmp.ne.s32.totalorder %s49, %s50
      %p62 = scmp.eq.s32.totalorder %s19, 1
      %p63 = por %p61, %p62
      %p65 = scmp.ne.s32.totalorder %s50, %s64
      %p66 = scmp.eq.s32.totalorder %s19, 0
      %p67 = por %p65, %p66
      %s69 = sadd.s32 %s68, 1
      %p72 = scmp.eq.s32.totalorder %s13, 1
      %p73 = scmp.ne.s32.totalorder %s68, %s70
      %p74 = scmp.eq.s32.totalorder %s13, 0
      %p75 = por %p73, %p74
      %p76 = scmp.ne.s32.totalorder %s68, %s70
      %p77 = scmp.eq.s32.totalorder %s18, 1
      %p78 = por %p76, %p77
      %p79 = scmp.ne.s32.totalorder %s70, %s71
      %p80 = scmp.eq.s32.totalorder %s18, 0
      %p81 = por %p79, %p80
      %p82 = scmp.ne.s32.totalorder %s70, %s71
      %p83 = scmp.eq.s32.totalorder %s19, 1
      %p84 = por %p82, %p83
      %p86 = scmp.ne.s32.totalorder %s71, %s85
      %p87 = scmp.eq.s32.totalorder %s19, 0
      %p88 = por %p86, %p87
      %s90 = sadd.s32 %s89, 1
      %p93 = scmp.eq.s32.totalorder %s13, 1
      %p94 = scmp.ne.s32.totalorder %s89, %s91
      %p95 = scmp.eq.s32.totalorder %s13, 0
      %p96 = por %p94, %p95
      %p97 = scmp.ne.s32.totalorder %s89, %s91
      %p98 = scmp.eq.s32.totalorder %s18, 1
      %p99 = por %p97, %p98
      %p100 = scmp.ne.s32.totalorder %s91, %s92
      %p101 = scmp.eq.s32.totalorder %s18, 0
      %p102 = por %p100, %p101
      %p103 = scmp.ne.s32.totalorder %s91, %s92
      %p104 = scmp.eq.s32.totalorder %s19, 1
      %p105 = por %p103, %p104
      %p107 = scmp.ne.s32.totalorder %s92, %s106
      %p108 = scmp.eq.s32.totalorder %s19, 0
      %p109 = por %p107, %p108
      %s111 = sadd.s32 %s110, 1
      %p114 = scmp.eq.s32.totalorder %s13, 1
      %p115 = scmp.ne.s32.totalorder %s110, %s112
      %p116 = scmp.eq.s32.totalorder %s13, 0
      %p117 = por %p115, %p116
      %p118 = scmp.ne.s32.totalorder %s110, %s112
      %p119 = scmp.eq.s32.totalorder %s18, 1
      %p120 = por %p118, %p119
      %p121 = scmp.ne.s32.totalorder %s112, %s113
      %p122 = scmp.eq.s32.totalorder %s18, 0
      %p123 = por %p121, %p122
      %p124 = scmp.ne.s32.totalorder %s112, %s113
      %p125 = scmp.eq.s32.totalorder %s19, 1
      %p126 = por %p124, %p125
      %p128 = scmp.ne.s32.totalorder %s113, %s127
      %p129 = scmp.eq.s32.totalorder %s19, 0
      %p130 = por %p128, %p129
      %s132 = sadd.s32 %s131, 1
      %p135 = scmp.eq.s32.totalorder %s13, 1
      %p136 = scmp.ne.s32.totalorder %s131, %s133
      %p137 = scmp.eq.s32.totalorder %s13, 0
      %p138 = por %p136, %p137
      %p139 = scmp.ne.s32.totalorder %s131, %s133
      %p140 = scmp.eq.s32.totalorder %s18, 1
      %p141 = por %p139, %p140
      %p142 = scmp.ne.s32.totalorder %s133, %s134
      %p143 = scmp.eq.s32.totalorder %s18, 0
      %p144 = por %p142, %p143
      %p145 = scmp.ne.s32.totalorder %s133, %s134
      %p146 = scmp.eq.s32.totalorder %s19, 1
      %p147 = por %p145, %p146
      %p149 = scmp.ne.s32.totalorder %s134, %s148
      %p150 = scmp.eq.s32.totalorder %s19, 0
      %p151 = por %p149, %p150
      %s153 = sadd.s32 %s152, 1
      %p156 = scmp.eq.s32.totalorder %s13, 1
      %p157 = scmp.ne.s32.totalorder %s152, %s154
      %p158 = scmp.eq.s32.totalorder %s13, 0
      %p159 = por %p157, %p158
      %p160 = scmp.ne.s32.totalorder %s152, %s154
      %p161 = scmp.eq.s32.totalorder %s18, 1
      %p162 = por %p160, %p161
      %p163 = scmp.ne.s32.totalorder %s154, %s155
      %p164 = scmp.eq.s32.totalorder %s18, 0
      %p165 = por %p163, %p164
      %p166 = scmp.ne.s32.totalorder %s154, %s155
      %p167 = scmp.eq.s32.totalorder %s19, 1
      %p168 = por %p166, %p167
      %p170 = scmp.ne.s32.totalorder %s155, %s169
      %p171 = scmp.eq.s32.totalorder %s19, 0
      %p172 = por %p170, %p171
      %s173 = ssub.s32 %s13, %s20
      %p174 = scmp.eq.s32.totalorder %s173, 0
      %s176 = sadd.s32 %s175, 1
      %s177 = scalar_select %p174, %s175, %s176
      %p180 = pneg %p174
      %p181 = scmp.eq.s32.totalorder %s13, 1
      %p182 = por %p180, %p181
      %p183 = scmp.ne.s32.totalorder %s175, %s178
      %p184 = scmp.eq.s32.totalorder %s13, 0
      %p185 = por %p183, %p184
      %p186 = scmp.ne.s32.totalorder %s175, %s178
      %p187 = scmp.eq.s32.totalorder %s18, 1
      %p188 = por %p186, %p187
      %p189 = scmp.ne.s32.totalorder %s178, %s179
      %p190 = scmp.eq.s32.totalorder %s18, 0
      %p191 = por %p189, %p190
      %p192 = scmp.ne.s32.totalorder %s178, %s179
      %p193 = scmp.eq.s32.totalorder %s19, 1
      %p194 = por %p192, %p193
      %p196 = scmp.ne.s32.totalorder %s179, %s195
      %p197 = scmp.eq.s32.totalorder %s19, 0
      %p198 = por %p196, %p197
      %p199 = scmp.le.s32.totalorder 1, %s13
      %p200 = scmp.lt.s32.totalorder %s13, 3
      %p201 = pnand %p199, %p200
      %p202 = pneg %p201
      // Predicated region
      $region9: #{multitask_forward.1} parent=5 // pred_check
        _
      $region10: #{multitask_forward.1} parent=5 // pred_check_branch
        %204 = sbr.rel (%p201) target = $region12
      $region11: #{multitask_forward.1} parent=5 // pred_region
        %s205 = ssub.s32 %s13, 1
        // Predicated region
        $region13: #{multitask_forward.1} parent=11 // pred_check
          %p206 = pneg %p60
        $region14: #{multitask_forward.1} parent=11 // pred_check_branch
          %208 = sbr.rel (%p206) target = $region16
        $region15: #{multitask_forward.1} parent=11 // pred_region
          _
        $region16: #{multitask_forward.1} parent=11 // pred_fallthru
          _
        // Predicated region
        $region17: #{multitask_forward.1} parent=11 // pred_check
          %p209 = pneg %p81
        $region18: #{multitask_forward.1} parent=11 // pred_check_branch
          %211 = sbr.rel (%p209) target = $region20
        $region19: #{multitask_forward.1} parent=11 // pred_region
          _
        $region20: #{multitask_forward.1} parent=11 // pred_fallthru
          _
        // Predicated region
        $region21: #{multitask_forward.1} parent=11 // pred_check
          %p212 = pneg %p102
        $region22: #{multitask_forward.1} parent=11 // pred_check_branch
          %214 = sbr.rel (%p212) target = $region24
        $region23: #{multitask_forward.1} parent=11 // pred_region
          _
        $region24: #{multitask_forward.1} parent=11 // pred_fallthru
          _
        // Predicated region
        $region25: #{multitask_forward.1} parent=11 // pred_check
          %p215 = pneg %p123
        $region26: #{multitask_forward.1} parent=11 // pred_check_branch
          %217 = sbr.rel (%p215) target = $region28
        $region27: #{multitask_forward.1} parent=11 // pred_region
          _
        $region28: #{multitask_forward.1} parent=11 // pred_fallthru
          _
        // Predicated region
        $region29: #{multitask_forward.1} parent=11 // pred_check
          %p218 = pneg %p144
        $region30: #{multitask_forward.1} parent=11 // pred_check_branch
          %220 = sbr.rel (%p218) target = $region32
        $region31: #{multitask_forward.1} parent=11 // pred_region
          _
        $region32: #{multitask_forward.1} parent=11 // pred_fallthru
          _
        // Predicated region
        $region33: #{multitask_forward.1} parent=11 // pred_check
          %p221 = pneg %p165
        $region34: #{multitask_forward.1} parent=11 // pred_check_branch
          %223 = sbr.rel (%p221) target = $region36
        $region35: #{multitask_forward.1} parent=11 // pred_region
          _
        $region36: #{multitask_forward.1} parent=11 // pred_fallthru
          _
      $region12: #{multitask_forward.1} parent=5 // pred_fallthru
        _
      %p224 = scmp.lt.s32.totalorder %s13, 2
      // Predicated region
      $region37: #{multitask_forward.1} parent=5 // pred_check
        %p225 = pneg %p224
      $region38: #{multitask_forward.1} parent=5 // pred_check_branch
        %227 = sbr.rel (%p225) target = $region40
      $region39: #{multitask_forward.1} parent=5 // pred_region
        // Predicated region
        $region41: #{multitask_forward.1} parent=39 // pred_check
          %p228 = pneg %p33
        $region42: #{multitask_forward.1} parent=39 // pred_check_branch
          %230 = sbr.rel (%p228) target = $region44
        $region43: #{multitask_forward.1} parent=39 // pred_region
          %s231 = smul.u32 14, %s13
          %s232 = ssub.s32 25, %s231
          %p233 = scmp.lt.s32.totalorder %s232, 14
          %s234 = scalar_select %p233, %s232, 14
          %s235 = smul.u32 8, %s234
          %p236 = scmp.lt.s32.totalorder %s231, 24
          %s237 = scalar_select %p236, %s231, 24
          %s238 = smul.addr %s237, 8
          %s239 = scalar_lea.vmem %s0, %s238
          %s240 = smul.u32 14, %s13
          %s241 = ssub.s32 25, %s240
          %p242 = scmp.lt.s32.totalorder %s241, 14
          %s243 = scalar_select %p242, %s241, 14
          %s244 = smul.u32 8, %s243
        $region44: #{multitask_forward.1} parent=39 // pred_fallthru
          _
      $region40: #{multitask_forward.1} parent=5 // pred_fallthru
        _
      %p245 = scmp.le.s32.totalorder 1, %s13
      %p246 = scmp.lt.s32.totalorder %s13, 3
      %p247 = pnand %p245, %p246
      %p248 = pneg %p247
      // Predicated region
      $region45: #{multitask_forward.1} parent=5 // pred_check
        _
      $region46: #{multitask_forward.1} parent=5 // pred_check_branch
        %250 = sbr.rel (%p247) target = $region48
      $region47: #{multitask_forward.1} parent=5 // pred_region
        %s251 = ssub.s32 %s13, 1
        %s252 = smul.u32 14, %s18
        %s253 = ssub.s32 25, %s252
        %p254 = scmp.lt.s32.totalorder %s253, 14
        %s255 = scalar_select %p254, %s253, 14
        %s256 = smul.u32 8, %s255
        %p257 = scmp.lt.s32.totalorder %s252, 24
        %s258 = scalar_select %p257, %s252, 24
        %s259 = smul.addr %s258, 8
        %s260 = scalar_lea.vmem %s0, %s259
        %p261 = pneg %p39
        %p262 = pneg %p36
        %p263 = pneg %p60
        %p264 = pneg %p57
        %p265 = pneg %p81
        %p266 = pneg %p78
        %p267 = pneg %p102
        %p268 = pneg %p99
        %p269 = pneg %p123
        %p270 = pneg %p120
        %p271 = pneg %p144
        %p272 = pneg %p141
        %p273 = pneg %p165
        %p274 = pneg %p162
        %p275 = pneg %p191
        %p276 = pneg %p188
        %s277 = sand.u32 %s178, 1
        %s278 = sand.u32 %s178, 1
        %s279 = smul.addr %s278, 56
        %s280 = scalar_lea.vmem [#allocation2], %s279
        %s281 = smul.u32 14, %s18
        %s282 = ssub.s32 25, %s281
        %p283 = scmp.lt.s32.totalorder %s282, 14
        %s284 = scalar_select %p283, %s282, 14
        %s285 = smul.u32 8, %s284
        %p286 = scmp.lt.s32.totalorder %s281, 24
        %s287 = scalar_select %p286, %s281, 24
        %s288 = smul.addr %s287, 8
        %s289 = scalar_lea.vmem %s0, %s288
        %s290 = smul.u32 14, %s18
        %s291 = ssub.s32 25, %s290
        %p292 = scmp.lt.s32.totalorder %s291, 14
        %s293 = scalar_select %p292, %s291, 14
        %s294 = smul.u32 8, %s293
        %s295 = smul.u32 14, %s18
        %s296 = ssub.s32 25, %s295
        %p297 = scmp.lt.s32.totalorder %s296, 14
        %s298 = scalar_select %p297, %s296, 14
        %s299 = smul.u32 4, %s298
        %v301 = vld [vmem:[%s289] sm:$0xff]
        %v302 = vld [vmem:[%s289 + $0x8] sm:$0xff]
        %v303 = vld [vmem:[%s289 + $0x10] sm:$0xff]
        %v304 = vld [vmem:[%s289 + $0x18] sm:$0xff]
        %v305 = vld [vmem:[%s289 + $0x20] sm:$0xff]
        %v306 = vld [vmem:[%s289 + $0x28] sm:$0xff]
        %v307 = vld [vmem:[%s289 + $0x30] sm:$0xff]
        %v308 = vld [vmem:[%s289 + $0x38] sm:$0xff]
        %v309 = vld [vmem:[%s289 + $0x40] sm:$0xff]
        %v310 = vld [vmem:[%s289 + $0x48] sm:$0xff]
        %v311 = vld [vmem:[%s289 + $0x50] sm:$0xff]
        %v312 = vld [vmem:[%s289 + $0x58] sm:$0xff]
        %v313 = vld [vmem:[%s289 + $0x60] sm:$0xff]
        %v314 = vld [vmem:[%s289 + $0x68] sm:$0xff]
        %v315 = vpack.c.bf16 %v302, %v301
        %v316 = vpack.c.bf16 %v304, %v303
        %v317 = vpack.c.bf16 %v306, %v305
        %v318 = vpack.c.bf16 %v308, %v307
        %v319 = vpack.c.bf16 %v310, %v309
        %v320 = vpack.c.bf16 %v312, %v311
        %v321 = vpack.c.bf16 %v314, %v313
        %v322 = vld [vmem:[%s1] sm:$0xf]
        %v323 = vld [vmem:[%s1 + $0x4] sm:$0xf]
        %v324 = vld [vmem:[%s1 + $0x8] sm:$0xf]
        %v325 = vld [vmem:[%s1 + $0xc] sm:$0xf]
        %v326 = vld [vmem:[%s1 + $0x10] sm:$0xf]
        %v327 = vld [vmem:[%s1 + $0x14] sm:$0xf]
        %v328 = vld [vmem:[%s1 + $0x18] sm:$0xf]
        %v329 = vld [vmem:[%s1 + $0x1c] sm:$0xf]
        %v330 = vld [vmem:[%s1 + $0x20] sm:$0xf]
        %v331 = vld [vmem:[%s1 + $0x24] sm:$0xf]
        %v332 = vld [vmem:[%s1 + $0x28] sm:$0xf]
        %v333 = vld [vmem:[%s1 + $0x2c] sm:$0xf]
        %v334 = vld [vmem:[%s2] sm:$0x1]
        %v336 = vperm.slane %v334, 0
        %v350 = vunpack.c.l.b16 %v322
        %v351 = vunpack.c.l.b16 %v323
        %v352 = vunpack.c.l.b16 %v324
        %v353 = vunpack.c.l.b16 %v325
        %v354 = vunpack.c.l.b16 %v326
        %v355 = vunpack.c.l.b16 %v327
        %v356 = vunpack.c.l.b16 %v328
        %v357 = vunpack.c.l.b16 %v329
        %v358 = vunpack.c.l.b16 %v330
        %v359 = vunpack.c.l.b16 %v331
        %v360 = vunpack.c.l.b16 %v332
        %v361 = vunpack.c.l.b16 %v333
        %v362 = vpack.c.b16 %v351, %v350
        %v363 = vpack.c.b16 %v353, %v352
        %v364 = vpack.c.b16 %v355, %v354
        %v365 = vpack.c.b16 %v357, %v356
        %v366 = vpack.c.b16 %v359, %v358
        %v367 = vpack.c.b16 %v361, %v360
        %vm374 = vcmask 785408
        %v376 = vsel %vm374, %v315, 0
        %v379 = vsel %vm374, %v316, 0
        %v382 = vsel %vm374, %v317, 0
        %v385 = vsel %vm374, %v318, 0
        %v388 = vsel %vm374, %v319, 0
        %v391 = vsel %vm374, %v320, 0
        %v394 = vsel %vm374, %v321, 0
        %396 = vmatpush.bf16.msra.mxu0 0
        %397 = vmatpush.bf16.msra.mxu0 0
        %398 = vmatpush.bf16.msra.mxu0 %v367
        %399 = vmatpush.bf16.msra.mxu0 %v366
        %400 = vmatpush.bf16.msra.mxu0 %v365
        %401 = vmatpush.bf16.msra.mxu0 %v364
        %402 = vmatpush.bf16.msra.mxu0 %v363
        %403 = vmatpush.bf16.msra.mxu0 %v362
        %404 = vmatmul.bf16.gmra.mxu0 %v376
        %v405 = vpop.f32.mrf.mxu0
        %v406 = vadd.f32 %v336, %v405
        %v407 = vpop.f32.mrf.mxu0
        %v408 = vadd.f32 %v336, %v407
        %409 = vmatmul.bf16.gmra.mxu0 %v379
        %v410 = vpop.f32.mrf.mxu0
        %v411 = vadd.f32 %v336, %v410
        %v412 = vpop.f32.mrf.mxu0
        %v413 = vadd.f32 %v336, %v412
        %414 = vmatmul.bf16.gmra.mxu0 %v382
        %v415 = vpop.f32.mrf.mxu0
        %v416 = vadd.f32 %v336, %v415
        %v417 = vpop.f32.mrf.mxu0
        %v418 = vadd.f32 %v336, %v417
        %419 = vmatmul.bf16.gmra.mxu0 %v385
        %v420 = vpop.f32.mrf.mxu0
        %v421 = vadd.f32 %v336, %v420
        %v422 = vpop.f32.mrf.mxu0
        %v423 = vadd.f32 %v336, %v422
        %424 = vmatmul.bf16.gmra.mxu0 %v388
        %v425 = vpop.f32.mrf.mxu0
        %v426 = vadd.f32 %v336, %v425
        %v427 = vpop.f32.mrf.mxu0
        %v428 = vadd.f32 %v336, %v427
        %429 = vmatmul.bf16.gmra.mxu0 %v391
        %v430 = vpop.f32.mrf.mxu0
        %v431 = vadd.f32 %v336, %v430
        %v432 = vpop.f32.mrf.mxu0
        %v433 = vadd.f32 %v336, %v432
        %434 = vmatmul.bf16.gmra.mxu0 %v394
        %v435 = vpop.f32.mrf.mxu0
        %v436 = vadd.f32 %v336, %v435
        %v437 = vpop.f32.mrf.mxu0
        %v438 = vadd.f32 %v336, %v437
        %439 = vdwg.mxu0
        %v440 = vmax.f32 %v406, 0.0
        %v441 = vmax.f32 %v408, 0.0
        %v442 = vmax.f32 %v411, 0.0
        %v443 = vmax.f32 %v413, 0.0
        %v444 = vmax.f32 %v416, 0.0
        %v445 = vmax.f32 %v418, 0.0
        %v446 = vmax.f32 %v421, 0.0
        %v447 = vmax.f32 %v423, 0.0
        %v448 = vmax.f32 %v426, 0.0
        %v449 = vmax.f32 %v428, 0.0
        %v450 = vmax.f32 %v431, 0.0
        %v451 = vmax.f32 %v433, 0.0
        %v452 = vmax.f32 %v436, 0.0
        %v453 = vmax.f32 %v438, 0.0
        %v454 = vpack.c.bf16 %v441, %v440
        %v455 = vpack.c.bf16 %v443, %v442
        %v456 = vpack.c.bf16 %v445, %v444
        %v457 = vpack.c.bf16 %v447, %v446
        %v458 = vpack.c.bf16 %v449, %v448
        %v459 = vpack.c.bf16 %v451, %v450
        %v460 = vpack.c.bf16 %v453, %v452
        %v461 = vld [vmem:[%s3] sm:$0xf]
        %v462 = vld [vmem:[%s3 + $0x4] sm:$0xf]
        %v463 = vld [vmem:[%s3 + $0x8] sm:$0xf]
        %v464 = vld [vmem:[%s3 + $0xc] sm:$0xf]
        %v465 = vld [vmem:[%s3 + $0x10] sm:$0xf]
        %v466 = vld [vmem:[%s3 + $0x14] sm:$0xf]
        %v467 = vld [vmem:[%s3 + $0x18] sm:$0xf]
        %v468 = vld [vmem:[%s3 + $0x1c] sm:$0xf]
        %v469 = vld [vmem:[%s3 + $0x20] sm:$0xf]
        %v470 = vld [vmem:[%s3 + $0x24] sm:$0xf]
        %v471 = vld [vmem:[%s3 + $0x28] sm:$0xf]
        %v472 = vld [vmem:[%s3 + $0x2c] sm:$0xf]
        %v473 = vld [vmem:[%s3 + $0x30] sm:$0xf]
        %v474 = vld [vmem:[%s3 + $0x34] sm:$0xf]
        %v475 = vld [vmem:[%s3 + $0x38] sm:$0xf]
        %v476 = vld [vmem:[%s3 + $0x3c] sm:$0xf]
        %v477 = vld [vmem:[%s4] sm:$0x1]
        %v479 = vperm.slane %v477, 0
        %v497 = vunpack.c.l.b16 %v461
        %v498 = vunpack.c.l.b16 %v462
        %v499 = vunpack.c.l.b16 %v463
        %v500 = vunpack.c.l.b16 %v464
        %v501 = vunpack.c.l.b16 %v465
        %v502 = vunpack.c.l.b16 %v466
        %v503 = vunpack.c.l.b16 %v467
        %v504 = vunpack.c.l.b16 %v468
        %v505 = vunpack.c.l.b16 %v469
        %v506 = vunpack.c.l.b16 %v470
        %v507 = vunpack.c.l.b16 %v471
        %v508 = vunpack.c.l.b16 %v472
        %v509 = vunpack.c.l.b16 %v473
        %v510 = vunpack.c.l.b16 %v474
        %v511 = vunpack.c.l.b16 %v475
        %v512 = vunpack.c.l.b16 %v476
        %v513 = vpack.c.b16 %v498, %v497
        %v514 = vpack.c.b16 %v500, %v499
        %v515 = vpack.c.b16 %v502, %v501
        %v516 = vpack.c.b16 %v504, %v503
        %v517 = vpack.c.b16 %v506, %v505
        %v518 = vpack.c.b16 %v508, %v507
        %v519 = vpack.c.b16 %v510, %v509
        %v520 = vpack.c.b16 %v512, %v511
        %529 = vmatpush.bf16.msra.mxu0 %v520
        %530 = vmatpush.bf16.msra.mxu0 %v519
        %531 = vmatpush.bf16.msra.mxu0 %v518
        %532 = vmatpush.bf16.msra.mxu0 %v517
        %533 = vmatpush.bf16.msra.mxu0 %v516
        %534 = vmatpush.bf16.msra.mxu0 %v515
        %535 = vmatpush.bf16.msra.mxu0 %v514
        %536 = vmatpush.bf16.msra.mxu0 %v513
        %537 = vmatmul.bf16.gmra.mxu0 %v454
        %v538 = vpop.f32.mrf.mxu0
        %v539 = vadd.f32 %v479, %v538
        %v540 = vpop.f32.mrf.mxu0
        %v541 = vadd.f32 %v479, %v540
        %542 = vmatmul.bf16.gmra.mxu0 %v455
        %v543 = vpop.f32.mrf.mxu0
        %v544 = vadd.f32 %v479, %v543
        %v545 = vpop.f32.mrf.mxu0
        %v546 = vadd.f32 %v479, %v545
        %547 = vmatmul.bf16.gmra.mxu0 %v456
        %v548 = vpop.f32.mrf.mxu0
        %v549 = vadd.f32 %v479, %v548
        %v550 = vpop.f32.mrf.mxu0
        %v551 = vadd.f32 %v479, %v550
        %552 = vmatmul.bf16.gmra.mxu0 %v457
        %v553 = vpop.f32.mrf.mxu0
        %v554 = vadd.f32 %v479, %v553
        %v555 = vpop.f32.mrf.mxu0
        %v556 = vadd.f32 %v479, %v555
        %557 = vmatmul.bf16.gmra.mxu0 %v458
        %v558 = vpop.f32.mrf.mxu0
        %v559 = vadd.f32 %v479, %v558
        %v560 = vpop.f32.mrf.mxu0
        %v561 = vadd.f32 %v479, %v560
        %562 = vmatmul.bf16.gmra.mxu0 %v459
        %v563 = vpop.f32.mrf.mxu0
        %v564 = vadd.f32 %v479, %v563
        %v565 = vpop.f32.mrf.mxu0
        %v566 = vadd.f32 %v479, %v565
        %567 = vmatmul.bf16.gmra.mxu0 %v460
        %v568 = vpop.f32.mrf.mxu0
        %v569 = vadd.f32 %v479, %v568
        %v570 = vpop.f32.mrf.mxu0
        %v571 = vadd.f32 %v479, %v570
        %572 = vdwg.mxu0
        %v573 = vmax.f32 %v539, 0.0
        %v574 = vmax.f32 %v541, 0.0
        %v575 = vmax.f32 %v544, 0.0
        %v576 = vmax.f32 %v546, 0.0
        %v577 = vmax.f32 %v549, 0.0
        %v578 = vmax.f32 %v551, 0.0
        %v579 = vmax.f32 %v554, 0.0
        %v580 = vmax.f32 %v556, 0.0
        %v581 = vmax.f32 %v559, 0.0
        %v582 = vmax.f32 %v561, 0.0
        %v583 = vmax.f32 %v564, 0.0
        %v584 = vmax.f32 %v566, 0.0
        %v585 = vmax.f32 %v569, 0.0
        %v586 = vmax.f32 %v571, 0.0
        %v587 = vpack.c.bf16 %v574, %v573
        %v588 = vpack.c.bf16 %v576, %v575
        %v589 = vpack.c.bf16 %v578, %v577
        %v590 = vpack.c.bf16 %v580, %v579
        %v591 = vpack.c.bf16 %v582, %v581
        %v592 = vpack.c.bf16 %v584, %v583
        %v593 = vpack.c.bf16 %v586, %v585
        %v594 = vld [vmem:[%s5] sm:$0xf]
        %v595 = vld [vmem:[%s5 + $0x4] sm:$0xf]
        %v596 = vld [vmem:[%s5 + $0x8] sm:$0xf]
        %v597 = vld [vmem:[%s5 + $0xc] sm:$0xf]
        %v598 = vld [vmem:[%s5 + $0x10] sm:$0xf]
        %v599 = vld [vmem:[%s5 + $0x14] sm:$0xf]
        %v600 = vld [vmem:[%s5 + $0x18] sm:$0xf]
        %v601 = vld [vmem:[%s5 + $0x1c] sm:$0xf]
        %v602 = vld [vmem:[%s5 + $0x20] sm:$0xf]
        %v603 = vld [vmem:[%s5 + $0x24] sm:$0xf]
        %v604 = vld [vmem:[%s5 + $0x28] sm:$0xf]
        %v605 = vld [vmem:[%s5 + $0x2c] sm:$0xf]
        %v606 = vld [vmem:[%s5 + $0x30] sm:$0xf]
        %v607 = vld [vmem:[%s5 + $0x34] sm:$0xf]
        %v608 = vld [vmem:[%s5 + $0x38] sm:$0xf]
        %v609 = vld [vmem:[%s5 + $0x3c] sm:$0xf]
        %v610 = vld [vmem:[%s6] sm:$0x1]
        %v612 = vperm.slane %v610, 0
        %v630 = vunpack.c.l.b16 %v594
        %v631 = vunpack.c.l.b16 %v595
        %v632 = vunpack.c.l.b16 %v596
        %v633 = vunpack.c.l.b16 %v597
        %v634 = vunpack.c.l.b16 %v598
        %v635 = vunpack.c.l.b16 %v599
        %v636 = vunpack.c.l.b16 %v600
        %v637 = vunpack.c.l.b16 %v601
        %v638 = vunpack.c.l.b16 %v602
        %v639 = vunpack.c.l.b16 %v603
        %v640 = vunpack.c.l.b16 %v604
        %v641 = vunpack.c.l.b16 %v605
        %v642 = vunpack.c.l.b16 %v606
        %v643 = vunpack.c.l.b16 %v607
        %v644 = vunpack.c.l.b16 %v608
        %v645 = vunpack.c.l.b16 %v609
        %v646 = vpack.c.b16 %v631, %v630
        %v647 = vpack.c.b16 %v633, %v632
        %v648 = vpack.c.b16 %v635, %v634
        %v649 = vpack.c.b16 %v637, %v636
        %v650 = vpack.c.b16 %v639, %v638
        %v651 = vpack.c.b16 %v641, %v640
        %v652 = vpack.c.b16 %v643, %v642
        %v653 = vpack.c.b16 %v645, %v644
        %662 = vmatpush.bf16.msra.mxu0 %v653
        %663 = vmatpush.bf16.msra.mxu0 %v652
        %664 = vmatpush.bf16.msra.mxu0 %v651
        %665 = vmatpush.bf16.msra.mxu0 %v650
        %666 = vmatpush.bf16.msra.mxu0 %v649
        %667 = vmatpush.bf16.msra.mxu0 %v648
        %668 = vmatpush.bf16.msra.mxu0 %v647
        %669 = vmatpush.bf16.msra.mxu0 %v646
        %670 = vmatmul.bf16.gmra.mxu0 %v587
        %v671 = vpop.f32.mrf.mxu0
        %v672 = vadd.f32 %v612, %v671
        %v673 = vpop.f32.mrf.mxu0
        %v674 = vadd.f32 %v612, %v673
        %675 = vmatmul.bf16.gmra.mxu0 %v588
        %v676 = vpop.f32.mrf.mxu0
        %v677 = vadd.f32 %v612, %v676
        %v678 = vpop.f32.mrf.mxu0
        %v679 = vadd.f32 %v612, %v678
        %680 = vmatmul.bf16.gmra.mxu0 %v589
        %v681 = vpop.f32.mrf.mxu0
        %v682 = vadd.f32 %v612, %v681
        %v683 = vpop.f32.mrf.mxu0
        %v684 = vadd.f32 %v612, %v683
        %685 = vmatmul.bf16.gmra.mxu0 %v590
        %v686 = vpop.f32.mrf.mxu0
        %v687 = vadd.f32 %v612, %v686
        %v688 = vpop.f32.mrf.mxu0
        %v689 = vadd.f32 %v612, %v688
        %690 = vmatmul.bf16.gmra.mxu0 %v591
        %v691 = vpop.f32.mrf.mxu0
        %v692 = vadd.f32 %v612, %v691
        %v693 = vpop.f32.mrf.mxu0
        %v694 = vadd.f32 %v612, %v693
        %695 = vmatmul.bf16.gmra.mxu0 %v592
        %v696 = vpop.f32.mrf.mxu0
        %v697 = vadd.f32 %v612, %v696
        %v698 = vpop.f32.mrf.mxu0
        %v699 = vadd.f32 %v612, %v698
        %700 = vmatmul.bf16.gmra.mxu0 %v593
        %v701 = vpop.f32.mrf.mxu0
        %v702 = vadd.f32 %v612, %v701
        %v703 = vpop.f32.mrf.mxu0
        %v704 = vadd.f32 %v612, %v703
        %705 = vdwg.mxu0
        %v706 = vpack.c.bf16 %v672, %v672
        %v707 = vpack.c.bf16 %v674, %v674
        %v708 = vpack.c.bf16 %v677, %v677
        %v709 = vpack.c.bf16 %v679, %v679
        %v710 = vpack.c.bf16 %v682, %v682
        %v711 = vpack.c.bf16 %v684, %v684
        %v712 = vpack.c.bf16 %v687, %v687
        %v713 = vpack.c.bf16 %v689, %v689
        %v714 = vpack.c.bf16 %v692, %v692
        %v715 = vpack.c.bf16 %v694, %v694
        %v716 = vpack.c.bf16 %v697, %v697
        %v717 = vpack.c.bf16 %v699, %v699
        %v718 = vpack.c.bf16 %v702, %v702
        %v719 = vpack.c.bf16 %v704, %v704
        %720 = vst [vmem:[%s280] sm:$0xf] %v706
        %721 = vst [vmem:[%s280 + $0x4] sm:$0xf] %v707
        %722 = vst [vmem:[%s280 + $0x8] sm:$0xf] %v708
        %723 = vst [vmem:[%s280 + $0xc] sm:$0xf] %v709
        %724 = vst [vmem:[%s280 + $0x10] sm:$0xf] %v710
        %725 = vst [vmem:[%s280 + $0x14] sm:$0xf] %v711
        %726 = vst [vmem:[%s280 + $0x18] sm:$0xf] %v712
        %727 = vst [vmem:[%s280 + $0x1c] sm:$0xf] %v713
        %728 = vst [vmem:[%s280 + $0x20] sm:$0xf] %v714
        %729 = vst [vmem:[%s280 + $0x24] sm:$0xf] %v715
        %730 = vst [vmem:[%s280 + $0x28] sm:$0xf] %v716
        %731 = vst [vmem:[%s280 + $0x2c] sm:$0xf] %v717
        %732 = vst [vmem:[%s280 + $0x30] sm:$0xf] %v718
        %733 = vst [vmem:[%s280 + $0x34] sm:$0xf] %v719
        %s734 = sand.u32 %s178, 1
        %s735 = sand.u32 %s178, 1
        %s736 = smul.addr %s735, 56
        %s737 = scalar_lea.vmem [#allocation2], %s736
        // Predicated region
        $region49: #{multitask_forward.1} parent=47 // pred_check
          %p738 = pneg %p188
        $region50: #{multitask_forward.1} parent=47 // pred_check_branch
          %740 = sbr.rel (%p738) target = $region52
        $region51: #{multitask_forward.1} parent=47 // pred_region
          %s741 = smul.u32 14, %s18
          %s742 = ssub.s32 25, %s741
          %p743 = scmp.lt.s32.totalorder %s742, 14
          %s744 = scalar_select %p743, %s742, 14
          %s745 = smul.u32 4, %s744
          %p746 = scmp.ne.s32.totalorder 0, %s745
          %s747 = smul.addr %s741, 4
          %s748 = scalar_lea.vmem %s7, %s747
          // Predicated region
          $region53: #{multitask_forward.1} parent=51 // pred_check
            %p749 = pneg %p746
          $region54: #{multitask_forward.1} parent=51 // pred_check_branch
            %751 = sbr.rel (%p749) target = $region56
          $region55: #{multitask_forward.1} parent=51 // pred_region
            // Predicated region
            $region57: #{multitask_forward.1} parent=55 // pred_check
              _
            $region58: #{multitask_forward.1} parent=55 // pred_check_branch
              %753 = sbr.rel target = $region60
            $region59: #{multitask_forward.1} parent=55 // pred_region
              // Predicated region
              $region79: #{multitask_forward.1} parent=59 // pred_check
                _
              $region80: #{multitask_forward.1} parent=59 // pred_check_branch
                %830 = sbr.rel (0) target = $region82
              $region81: #{multitask_forward.1} parent=59 // pred_region
                %s832 = ssub.s32 16, 1
                %s833 = sdiv.u32.pop %s744, 14
                %s834 = srem.u32.pop %s744, 14
                // While loop
                $region83: #{multitask_forward.1} parent=81 // loop_pre_header
                  _
                $region84: #{multitask_forward.1} parent=81 // loop_header
                  %s836 = sphi 0, %s838
                  %p837 = scmp.ge.s32.totalorder %s836, %s833
                  %s841 = sphi 0, %s874
                  %s842 = sphi %s737, %s877
                  %s843 = sphi %s748, %s878
                $region85: #{multitask_forward.1} parent=81 // loop_header_branch
                  %840 = sbr.rel (%p837) target = $region89
                $region86: #{multitask_forward.1} parent=81 // loop_body
                  %v844 = vld [vmem:[%s842] sm:%s832]
                  %845 = vst [vmem:[%s843] sm:%s832] %v844
                  %v846 = vld [vmem:[%s842 + $0x4] sm:%s832]
                  %847 = vst [vmem:[%s843 + $0x4] sm:%s832] %v846
                  %v848 = vld [vmem:[%s842 + $0x8] sm:%s832]
                  %849 = vst [vmem:[%s843 + $0x8] sm:%s832] %v848
                  %v850 = vld [vmem:[%s842 + $0xc] sm:%s832]
                  %851 = vst [vmem:[%s843 + $0xc] sm:%s832] %v850
                  %v852 = vld [vmem:[%s842 + $0x10] sm:%s832]
                  %853 = vst [vmem:[%s843 + $0x10] sm:%s832] %v852
                  %v854 = vld [vmem:[%s842 + $0x14] sm:%s832]
                  %855 = vst [vmem:[%s843 + $0x14] sm:%s832] %v854
                  %v856 = vld [vmem:[%s842 + $0x18] sm:%s832]
                  %857 = vst [vmem:[%s843 + $0x18] sm:%s832] %v856
                  %v858 = vld [vmem:[%s842 + $0x1c] sm:%s832]
                  %859 = vst [vmem:[%s843 + $0x1c] sm:%s832] %v858
                  %v860 = vld [vmem:[%s842 + $0x20] sm:%s832]
                  %861 = vst [vmem:[%s843 + $0x20] sm:%s832] %v860
                  %v862 = vld [vmem:[%s842 + $0x24] sm:%s832]
                  %863 = vst [vmem:[%s843 + $0x24] sm:%s832] %v862
                  %v864 = vld [vmem:[%s842 + $0x28] sm:%s832]
                  %865 = vst [vmem:[%s843 + $0x28] sm:%s832] %v864
                  %v866 = vld [vmem:[%s842 + $0x2c] sm:%s832]
                  %867 = vst [vmem:[%s843 + $0x2c] sm:%s832] %v866
                  %v868 = vld [vmem:[%s842 + $0x30] sm:%s832]
                  %869 = vst [vmem:[%s843 + $0x30] sm:%s832] %v868
                  %v870 = vld [vmem:[%s842 + $0x34] sm:%s832]
                  %871 = vst [vmem:[%s843 + $0x34] sm:%s832] %v870
                  %s872 = sadd.s32 1, %s841
                  %p873 = scmp.ge.s32.totalorder %s872, %s833
                  %s874 = scalar_select %p873, 0, %s872
                  %s875 = smul.u32 %s874, 56
                  %s876 = smul.u32 %s874, 56
                  %s877 = scalar_lea.vmem %s737, %s875 [#allocation2]
                  %s878 = scalar_lea.vmem %s748, %s876
                $region87: #{multitask_forward.1} parent=81 // loop_footer
                  %s838 = sadd.s32 %s836, 1
                $region88: #{multitask_forward.1} parent=81 // loop_footer_branch
                  %835 = sbr.rel target = $region84
                $region89: #{multitask_forward.1} parent=81 // loop_exit
                  _
                %s879 = sdiv.u32.pop %s744, 14
                %s880 = srem.u32.pop %s744, 14
                %s881 = smul.u32 %s879, 14
                %s882 = smul.u32 4, %s881
                %s883 = scalar_lea.vmem %s737, %s882 [#allocation2]
                %s884 = smul.u32 4, %s881
                %s885 = scalar_lea.vmem %s748, %s884
                // While loop
                $region90: #{multitask_forward.1} parent=81 // loop_pre_header
                  _
                $region91: #{multitask_forward.1} parent=81 // loop_header
                  %s887 = sphi 0, %s889
                  %p888 = scmp.ge.s32.totalorder %s887, %s880
                  %s892 = sphi 0, %s899
                  %s893 = sphi %s883, %s902
                  %s894 = sphi %s885, %s903
                $region92: #{multitask_forward.1} parent=81 // loop_header_branch
                  %891 = sbr.rel (%p888) target = $region96
                $region93: #{multitask_forward.1} parent=81 // loop_body
                  %v895 = vld [vmem:[%s893] sm:%s832]
                  %896 = vst [vmem:[%s894] sm:%s832] %v895
                  %s897 = sadd.s32 1, %s892
                  %p898 = scmp.ge.s32.totalorder %s897, %s880
                  %s899 = scalar_select %p898, 0, %s897
                  %s900 = smul.u32 %s899, 4
                  %s901 = smul.u32 %s899, 4
                  %s902 = scalar_lea.vmem %s883, %s900 [#allocation2]
                  %s903 = scalar_lea.vmem %s885, %s901
                $region94: #{multitask_forward.1} parent=81 // loop_footer
                  %s889 = sadd.s32 %s887, 1
                $region95: #{multitask_forward.1} parent=81 // loop_footer_branch
                  %886 = sbr.rel target = $region91
                $region96: #{multitask_forward.1} parent=81 // loop_exit
                  _
              $region82: #{multitask_forward.1} parent=59 // pred_fallthru
                _
            $region60: #{multitask_forward.1} parent=55 // pred_fallthru
              _
            // Predicated region
            $region61: #{multitask_forward.1} parent=55 // pred_check
              _
            $region62: #{multitask_forward.1} parent=55 // pred_check_branch
              %755 = sbr.rel (0) target = $region64
            $region63: #{multitask_forward.1} parent=55 // pred_region
              %s757 = ssub.s32 16, 1
              %s758 = sdiv.u32.pop %s744, 14
              %s759 = srem.u32.pop %s744, 14
              // While loop
              $region65: #{multitask_forward.1} parent=63 // loop_pre_header
                _
              $region66: #{multitask_forward.1} parent=63 // loop_header
                %s761 = sphi 0, %s763
                %p762 = scmp.ge.s32.totalorder %s761, %s758
                %s766 = sphi 0, %s799
                %s767 = sphi %s737, %s802
                %s768 = sphi %s748, %s803
              $region67: #{multitask_forward.1} parent=63 // loop_header_branch
                %765 = sbr.rel (%p762) target = $region71
              $region68: #{multitask_forward.1} parent=63 // loop_body
                %v769 = vld [vmem:[%s767] sm:%s757]
                %770 = vst [vmem:[%s768] sm:%s757] %v769
                %v771 = vld [vmem:[%s767 + $0x4] sm:%s757]
                %772 = vst [vmem:[%s768 + $0x4] sm:%s757] %v771
                %v773 = vld [vmem:[%s767 + $0x8] sm:%s757]
                %774 = vst [vmem:[%s768 + $0x8] sm:%s757] %v773
                %v775 = vld [vmem:[%s767 + $0xc] sm:%s757]
                %776 = vst [vmem:[%s768 + $0xc] sm:%s757] %v775
                %v777 = vld [vmem:[%s767 + $0x10] sm:%s757]
                %778 = vst [vmem:[%s768 + $0x10] sm:%s757] %v777
                %v779 = vld [vmem:[%s767 + $0x14] sm:%s757]
                %780 = vst [vmem:[%s768 + $0x14] sm:%s757] %v779
                %v781 = vld [vmem:[%s767 + $0x18] sm:%s757]
                %782 = vst [vmem:[%s768 + $0x18] sm:%s757] %v781
                %v783 = vld [vmem:[%s767 + $0x1c] sm:%s757]
                %784 = vst [vmem:[%s768 + $0x1c] sm:%s757] %v783
                %v785 = vld [vmem:[%s767 + $0x20] sm:%s757]
                %786 = vst [vmem:[%s768 + $0x20] sm:%s757] %v785
                %v787 = vld [vmem:[%s767 + $0x24] sm:%s757]
                %788 = vst [vmem:[%s768 + $0x24] sm:%s757] %v787
                %v789 = vld [vmem:[%s767 + $0x28] sm:%s757]
                %790 = vst [vmem:[%s768 + $0x28] sm:%s757] %v789
                %v791 = vld [vmem:[%s767 + $0x2c] sm:%s757]
                %792 = vst [vmem:[%s768 + $0x2c] sm:%s757] %v791
                %v793 = vld [vmem:[%s767 + $0x30] sm:%s757]
                %794 = vst [vmem:[%s768 + $0x30] sm:%s757] %v793
                %v795 = vld [vmem:[%s767 + $0x34] sm:%s757]
                %796 = vst [vmem:[%s768 + $0x34] sm:%s757] %v795
                %s797 = sadd.s32 1, %s766
                %p798 = scmp.ge.s32.totalorder %s797, %s758
                %s799 = scalar_select %p798, 0, %s797
                %s800 = smul.u32 %s799, 56
                %s801 = smul.u32 %s799, 56
                %s802 = scalar_lea.vmem %s737, %s800 [#allocation2]
                %s803 = scalar_lea.vmem %s748, %s801
              $region69: #{multitask_forward.1} parent=63 // loop_footer
                %s763 = sadd.s32 %s761, 1
              $region70: #{multitask_forward.1} parent=63 // loop_footer_branch
                %760 = sbr.rel target = $region66
              $region71: #{multitask_forward.1} parent=63 // loop_exit
                _
              %s804 = sdiv.u32.pop %s744, 14
              %s805 = srem.u32.pop %s744, 14
              %s806 = smul.u32 %s804, 14
              %s807 = smul.u32 4, %s806
              %s808 = scalar_lea.vmem %s737, %s807 [#allocation2]
              %s809 = smul.u32 4, %s806
              %s810 = scalar_lea.vmem %s748, %s809
              // While loop
              $region72: #{multitask_forward.1} parent=63 // loop_pre_header
                _
              $region73: #{multitask_forward.1} parent=63 // loop_header
                %s812 = sphi 0, %s814
                %p813 = scmp.ge.s32.totalorder %s812, %s805
                %s817 = sphi 0, %s824
                %s818 = sphi %s808, %s827
                %s819 = sphi %s810, %s828
              $region74: #{multitask_forward.1} parent=63 // loop_header_branch
                %816 = sbr.rel (%p813) target = $region78
              $region75: #{multitask_forward.1} parent=63 // loop_body
                %v820 = vld [vmem:[%s818] sm:%s757]
                %821 = vst [vmem:[%s819] sm:%s757] %v820
                %s822 = sadd.s32 1, %s817
                %p823 = scmp.ge.s32.totalorder %s822, %s805
                %s824 = scalar_select %p823, 0, %s822
                %s825 = smul.u32 %s824, 4
                %s826 = smul.u32 %s824, 4
                %s827 = scalar_lea.vmem %s808, %s825 [#allocation2]
                %s828 = scalar_lea.vmem %s810, %s826
              $region76: #{multitask_forward.1} parent=63 // loop_footer
                %s814 = sadd.s32 %s812, 1
              $region77: #{multitask_forward.1} parent=63 // loop_footer_branch
                %811 = sbr.rel target = $region73
              $region78: #{multitask_forward.1} parent=63 // loop_exit
                _
            $region64: #{multitask_forward.1} parent=55 // pred_fallthru
              _
          $region56: #{multitask_forward.1} parent=51 // pred_fallthru
            _
          %904 = vnop
        $region52: #{multitask_forward.1} parent=47 // pred_fallthru
          _
      $region48: #{multitask_forward.1} parent=5 // pred_fallthru
        _
      %p905 = scmp.le.s32.totalorder 2, %s13
      // Predicated region
      $region97: #{multitask_forward.1} parent=5 // pred_check
        %p906 = pneg %p905
      $region98: #{multitask_forward.1} parent=5 // pred_check_branch
        %908 = sbr.rel (%p906) target = $region100
      $region99: #{multitask_forward.1} parent=5 // pred_region
        %s909 = ssub.s32 %s13, 2
        // Predicated region
        $region101: #{multitask_forward.1} parent=99 // pred_check
          %p910 = pneg %p194
        $region102: #{multitask_forward.1} parent=99 // pred_check_branch
          %912 = sbr.rel (%p910) target = $region104
        $region103: #{multitask_forward.1} parent=99 // pred_region
          %s913 = sand.u32 %s179, 1
          %s914 = sand.u32 %s179, 1
          %s915 = smul.addr %s914, 56
          %s916 = scalar_lea.vmem [#allocation2], %s915
        $region104: #{multitask_forward.1} parent=99 // pred_fallthru
          _
      $region100: #{multitask_forward.1} parent=5 // pred_fallthru
        _
    $region6: #{multitask_forward.1} parent=1 // loop_footer
      %s17 = sadd.s32 1, %s13
    $region7: #{multitask_forward.1} parent=1 // loop_footer_branch
      %12 = sbr.rel target = $region3
    $region8: #{multitask_forward.1} parent=1 // loop_exit
      _

</llo_original>
